<compile_context>
chip_gen: v7x
topology: tpu7x:2x2x1
jax: 0.10.0
libtpu: 0.0.40
codegen_flags: <defaults>
</compile_context>

<pallas_src>
import jax
import jax.numpy as jnp
from jax.experimental import pallas as pl
from jax.experimental.pallas import tpu as pltpu


def _round_up(x, m):
    return (x + m - 1) // m * m


def n4_kernel(src_ref, dst_ref, coeff_ref, h0_ref, out_ref):
    # src_ref   : (E_pad, 1) int32   source node index per edge (-1 = padding)
    # dst_ref   : (1, E_pad) int32   destination node index per edge (-1 = pad)
    # coeff_ref : (L, E_pad) f32     weight_tensor * layer_weights (0 for pad)
    # h0_ref    : (N_pad, TF) f32    input node features for this F tile
    # out_ref   : (N_pad, TF) f32
    n_pad, _ = h0_ref.shape
    e_pad = src_ref.shape[0]
    n_layers = coeff_ref.shape[0]

    # One-hot gather matrix S^T (E_pad, N_pad) and destination mask
    # (N_pad, E_pad), built once per F tile and reused by every layer.
    # 0/1 values are exact in bf16 -> bf16 MXU path with f32 accumulation.
    col_ids = jax.lax.broadcasted_iota(jnp.int32, (e_pad, n_pad), 1)
    s_t = (col_ids == src_ref[...]).astype(jnp.bfloat16)          # (E_pad, N_pad)
    row_ids = jax.lax.broadcasted_iota(jnp.int32, (n_pad, e_pad), 0)
    dst_mask = row_ids == dst_ref[...]                            # (N_pad, E_pad)

    h0 = h0_ref[...]
    h = h0
    # Static unroll: n_layers is small (3).  For large L switch to
    # lax.fori_loop with the final (sigmoid) layer peeled to bound live ranges.
    for k in range(n_layers):
        # gather: gathered[e, :] = h[src[e], :]
        gathered = jnp.dot(s_t, h.astype(jnp.bfloat16),
                           preferred_element_type=jnp.float32)    # (E_pad, TF)
        # fold the per-edge coefficient into the scatter matrix:
        # D_k[i, e] = coeff[k, e] if dst[e] == i else 0
        d_k = jnp.where(dst_mask, coeff_ref[k:k + 1, :],
                        0.0).astype(jnp.bfloat16)                  # (N_pad, E_pad)
        # scatter-add with coefficient applied: h_new[i,:] = sum_e D_k[i,e]*gathered[e,:]
        h_new = jnp.dot(d_k, gathered.astype(jnp.bfloat16),
                        preferred_element_type=jnp.float32)        # (N_pad, TF)
        if k < n_layers - 1:
            h = h_new + h0                                         # residual
        else:
            h = jax.nn.sigmoid(2.0 * h_new)                        # final layer
    out_ref[...] = h


def n4_forward(h0, edge_index, weight_tensor, layer_weights, *, tf=None):
    """h0: (N, F), edge_index: (2, E) int, weight_tensor: (E,),
    layer_weights: (L, E)  ->  (N, F) f32"""
    N, F = h0.shape
    E = edge_index.shape[1]
    L = layer_weights.shape[0]

    n_pad = _round_up(max(N, 8), 8)         # sublane multiple
    f_pad = _round_up(max(F, 128), 128)     # lane-dense features
    e_pad = _round_up(max(E, 256), 256)     # 256-aligned edge axis (v6e/v7x MXU)

    if tf is None:
        tf = 256 if f_pad % 256 == 0 else 128   # F tile (lane-dense)
    grid = (f_pad // tf,)

    # Layout plumbing + zero/sentinel padding (pure wrapper-side reshapes).
    h0_p = jnp.zeros((n_pad, f_pad), jnp.float32).at[:N, :F].set(
        h0.astype(jnp.float32))
    src_col = jnp.full((e_pad, 1), -1, jnp.int32).at[:E, 0].set(
        edge_index[0].astype(jnp.int32))
    dst_row = jnp.full((1, e_pad), -1, jnp.int32).at[0, :E].set(
        edge_index[1].astype(jnp.int32))
    # Per-edge, per-layer coefficient computed once on the wrapper side.
    coeffs = jnp.zeros((L, e_pad), jnp.float32).at[:, :E].set(
        (weight_tensor[None, :] * layer_weights).astype(jnp.float32))

    # Advisory cost estimate for XLA's scheduler.
    flops = 4 * L * n_pad * e_pad * f_pad
    bytes_accessed = 4 * (h0_p.size + src_col.size + dst_row.size
                          + coeffs.size + n_pad * f_pad)
    cost = pl.CostEstimate(flops=flops,
                           transcendentals=n_pad * f_pad,
                           bytes_accessed=bytes_accessed)

    # Per-grid-step VMEM footprint (double-buffered I/O + in-kernel transients),
    # with headroom; capped at 56 MiB to stay safe on v7x (64 MiB physical).
    step_bytes = (
        2 * 2 * (n_pad * tf * 4)                 # h0 tile + out tile, x2 buffers
        + 2 * (L * e_pad * 4                     # coeffs
               + e_pad * 128 * 4                 # src column (lane-padded)
               + 8 * e_pad * 4)                  # dst row (sublane-padded)
        + 2 * e_pad * max(n_pad, 128) * 4        # iota / one-hot transients
        + 2 * n_pad * e_pad * 4                  # dst_mask + per-layer d_k
        + 2 * e_pad * tf * 4                     # gathered f32 + bf16 copy
    )
    vmem_limit = int(min(max(2 * step_bytes, 32 * 2**20), 56 * 2**20))

    out_p = pl.pallas_call(
        n4_kernel,
        out_shape=jax.ShapeDtypeStruct((n_pad, f_pad), jnp.float32),
        grid=grid,
        in_specs=[
            pl.BlockSpec((e_pad, 1), lambda j: (0, 0)),
            pl.BlockSpec((1, e_pad), lambda j: (0, 0)),
            pl.BlockSpec((L, e_pad), lambda j: (0, 0)),
            pl.BlockSpec((n_pad, tf), lambda j: (0, j)),
        ],
        out_specs=pl.BlockSpec((n_pad, tf), lambda j: (0, j)),
        compiler_params=pltpu.CompilerParams(
            dimension_semantics=("parallel",),
            vmem_limit_bytes=vmem_limit),
        cost_estimate=cost,
    )(src_col, dst_row, coeffs, h0_p)
    return out_p[:N, :F]


def n4_reference(h0, edge_index, weight_tensor, layer_weights):
    """Pure-JAX f32 reference mirroring the PyTorch/PyG semantics."""
    src, dst = edge_index[0], edge_index[1]

    def one_layer(h, w_k):
        msg = (weight_tensor * w_k)[:, None] * h[src]              # (E, F)
        return jnp.zeros_like(h).at[dst].add(msg)                  # scatter-add

    h = h0
    L = layer_weights.shape[0]
    for k in range(L - 1):
        h = one_layer(h, layer_weights[k]) + h0
    h = one_layer(h, layer_weights[L - 1])
    return jax.nn.sigmoid(2.0 * h)


if __name__ == "__main__":
    N, F, E, L = 8, 32, 16, 3

    key = jax.random.PRNGKey(0)
    k_h, k_src, k_dst, k_wt, k_lw = jax.random.split(key, 5)

    h0 = jax.random.normal(k_h, (N, F), dtype=jnp.float32)
    src = jax.random.randint(k_src, (E,), 0, N, dtype=jnp.int32)
    dst = jax.random.randint(k_dst, (E,), 0, N, dtype=jnp.int32)
    edge_index = jnp.stack([src, dst], axis=0)                     # (2, E)
    weight_tensor = jax.random.normal(k_wt, (E,), dtype=jnp.float32)
    # Parameter init: normal(std = 1/sqrt(num_edges)) per layer (deterministic).
    layer_weights = jax.random.normal(k_lw, (L, E), dtype=jnp.float32) / jnp.sqrt(
        jnp.float32(E))

    out = jax.block_until_ready(
        n4_forward(h0, edge_index, weight_tensor, layer_weights))
    ref = n4_reference(h0, edge_index, weight_tensor, layer_weights)

    assert out.shape == (N, F)
    # bf16 MXU operands (f32 accumulation) introduce ~1e-3 relative error per
    # layer on the messages; outputs are post-sigmoid in (0,1).
    max_err = float(jnp.max(jnp.abs(out - ref)))
    assert max_err < 5e-2, f"mismatch vs reference (max abs err {max_err})"

    print("KERNEL_OK")
</pallas_src>

<mosaic_0001>
module attributes {stable_mosaic.version = 11 : i64} {
  func.func @n4_kernel(%arg0: i32, %arg1: memref<256x1xi32, #tpu.memory_space<vmem>>, %arg2: memref<1x256xi32, #tpu.memory_space<vmem>>, %arg3: memref<3x256xf32, #tpu.memory_space<vmem>>, %arg4: memref<8x128xf32, #tpu.memory_space<vmem>>, %arg5: memref<8x128xf32, #tpu.memory_space<vmem>>) attributes {dimension_semantics = [#tpu.dimension_semantics<parallel>], iteration_bounds = array<i64: 1>, scalar_prefetch = 0 : i64, scratch_operands = 0 : i64, tpu.core_type = #tpu.core_type<tc>, window_params = [{pipeline_mode = #tpu.pipeline_mode<synchronous>, transform_indices = @transform_0, window_bounds = array<i64: 256, 1>}, {pipeline_mode = #tpu.pipeline_mode<synchronous>, transform_indices = @transform_1, window_bounds = array<i64: 1, 256>}, {pipeline_mode = #tpu.pipeline_mode<synchronous>, transform_indices = @transform_2, window_bounds = array<i64: 3, 256>}, {transform_indices = @transform_3, window_bounds = array<i64: 8, 128>}, {transform_indices = @transform_4, window_bounds = array<i64: 8, 128>}]} {
    %0 = tpu.iota {dimensions = array<i32: 1>} : vector<256x8xi32>
    %c0 = arith.constant 0 : index
    %c0_0 = arith.constant 0 : index
    %1 = vector.load %arg1[%c0, %c0_0] : memref<256x1xi32, #tpu.memory_space<vmem>>, vector<256x1xi32>
    %2 = vector.broadcast %1 : vector<256x1xi32> to vector<256x8xi32>
    %3 = arith.cmpi eq, %0, %2 : vector<256x8xi32>
    %4 = arith.extui %3 : vector<256x8xi1> to vector<256x8xi32>
    %5 = arith.sitofp %4 : vector<256x8xi32> to vector<256x8xf32>
    %6 = arith.truncf %5 : vector<256x8xf32> to vector<256x8xbf16>
    %7 = tpu.iota {dimensions = array<i32: 0>} : vector<8x256xi32>
    %c0_1 = arith.constant 0 : index
    %c0_2 = arith.constant 0 : index
    %8 = vector.load %arg2[%c0_1, %c0_2] : memref<1x256xi32, #tpu.memory_space<vmem>>, vector<1x256xi32>
    %9 = vector.broadcast %8 : vector<1x256xi32> to vector<8x256xi32>
    %10 = arith.cmpi eq, %7, %9 : vector<8x256xi32>
    %c0_3 = arith.constant 0 : index
    %c0_4 = arith.constant 0 : index
    %11 = vector.load %arg4[%c0_3, %c0_4] : memref<8x128xf32, #tpu.memory_space<vmem>>, vector<8x128xf32>
    %12 = arith.truncf %11 : vector<8x128xf32> to vector<8x128xbf16>
    %cst = arith.constant dense<0.000000e+00> : vector<256x128xf32>
    %13 = tpu.matmul %6, %12, %cst {dimension_numbers = #tpu.dot_dimension_numbers<[1], [0], [0], [1], [0, 0, 1, 1], [], []>} : vector<256x8xbf16>, vector<8x128xbf16>, vector<256x128xf32> -> vector<256x128xf32>
    %c0_5 = arith.constant 0 : index
    %c0_6 = arith.constant 0 : index
    %14 = vector.load %arg3[%c0_5, %c0_6] : memref<3x256xf32, #tpu.memory_space<vmem>>, vector<1x256xf32>
    %cst_7 = arith.constant 0.000000e+00 : f32
    %15 = vector.shape_cast %14 : vector<1x256xf32> to vector<1x256xf32>
    %16 = vector.broadcast %15 : vector<1x256xf32> to vector<8x256xf32>
    %17 = vector.broadcast %cst_7 : f32 to vector<8x256xf32>
    %18 = arith.select %10, %16, %17 : vector<8x256xi1>, vector<8x256xf32>
    %19 = arith.truncf %18 : vector<8x256xf32> to vector<8x256xbf16>
    %20 = arith.truncf %13 : vector<256x128xf32> to vector<256x128xbf16>
    %cst_8 = arith.constant dense<0.000000e+00> : vector<8x128xf32>
    %21 = tpu.matmul %19, %20, %cst_8 {dimension_numbers = #tpu.dot_dimension_numbers<[1], [0], [0], [1], [0, 0, 1, 1], [], []>} : vector<8x256xbf16>, vector<256x128xbf16>, vector<8x128xf32> -> vector<8x128xf32>
    %22 = arith.addf %21, %11 : vector<8x128xf32>
    %23 = arith.truncf %22 : vector<8x128xf32> to vector<8x128xbf16>
    %cst_9 = arith.constant dense<0.000000e+00> : vector<256x128xf32>
    %24 = tpu.matmul %6, %23, %cst_9 {dimension_numbers = #tpu.dot_dimension_numbers<[1], [0], [0], [1], [0, 0, 1, 1], [], []>} : vector<256x8xbf16>, vector<8x128xbf16>, vector<256x128xf32> -> vector<256x128xf32>
    %c1 = arith.constant 1 : index
    %c0_10 = arith.constant 0 : index
    %25 = vector.load %arg3[%c1, %c0_10] : memref<3x256xf32, #tpu.memory_space<vmem>>, vector<1x256xf32>
    %cst_11 = arith.constant 0.000000e+00 : f32
    %26 = vector.shape_cast %25 : vector<1x256xf32> to vector<1x256xf32>
    %27 = vector.broadcast %26 : vector<1x256xf32> to vector<8x256xf32>
    %28 = vector.broadcast %cst_11 : f32 to vector<8x256xf32>
    %29 = arith.select %10, %27, %28 : vector<8x256xi1>, vector<8x256xf32>
    %30 = arith.truncf %29 : vector<8x256xf32> to vector<8x256xbf16>
    %31 = arith.truncf %24 : vector<256x128xf32> to vector<256x128xbf16>
    %cst_12 = arith.constant dense<0.000000e+00> : vector<8x128xf32>
    %32 = tpu.matmul %30, %31, %cst_12 {dimension_numbers = #tpu.dot_dimension_numbers<[1], [0], [0], [1], [0, 0, 1, 1], [], []>} : vector<8x256xbf16>, vector<256x128xbf16>, vector<8x128xf32> -> vector<8x128xf32>
    %33 = arith.addf %32, %11 : vector<8x128xf32>
    %34 = arith.truncf %33 : vector<8x128xf32> to vector<8x128xbf16>
    %cst_13 = arith.constant dense<0.000000e+00> : vector<256x128xf32>
    %35 = tpu.matmul %6, %34, %cst_13 {dimension_numbers = #tpu.dot_dimension_numbers<[1], [0], [0], [1], [0, 0, 1, 1], [], []>} : vector<256x8xbf16>, vector<8x128xbf16>, vector<256x128xf32> -> vector<256x128xf32>
    %c2 = arith.constant 2 : index
    %c0_14 = arith.constant 0 : index
    %36 = vector.load %arg3[%c2, %c0_14] : memref<3x256xf32, #tpu.memory_space<vmem>>, vector<1x256xf32>
    %cst_15 = arith.constant 0.000000e+00 : f32
    %37 = vector.shape_cast %36 : vector<1x256xf32> to vector<1x256xf32>
    %38 = vector.broadcast %37 : vector<1x256xf32> to vector<8x256xf32>
    %39 = vector.broadcast %cst_15 : f32 to vector<8x256xf32>
    %40 = arith.select %10, %38, %39 : vector<8x256xi1>, vector<8x256xf32>
    %41 = arith.truncf %40 : vector<8x256xf32> to vector<8x256xbf16>
    %42 = arith.truncf %35 : vector<256x128xf32> to vector<256x128xbf16>
    %cst_16 = arith.constant dense<0.000000e+00> : vector<8x128xf32>
    %43 = tpu.matmul %41, %42, %cst_16 {dimension_numbers = #tpu.dot_dimension_numbers<[1], [0], [0], [1], [0, 0, 1, 1], [], []>} : vector<8x256xbf16>, vector<256x128xbf16>, vector<8x128xf32> -> vector<8x128xf32>
    %cst_17 = arith.constant 2.000000e+00 : f32
    %44 = vector.broadcast %cst_17 : f32 to vector<8x128xf32>
    %45 = arith.mulf %44, %43 : vector<8x128xf32>
    %46 = arith.negf %45 : vector<8x128xf32>
    %47 = math.exp %46 : vector<8x128xf32>
    %cst_18 = arith.constant 1.000000e+00 : f32
    %48 = vector.broadcast %cst_18 : f32 to vector<8x128xf32>
    %49 = arith.addf %48, %47 : vector<8x128xf32>
    %50 = arith.divf %48, %49 : vector<8x128xf32>
    %c0_19 = arith.constant 0 : index
    %c0_20 = arith.constant 0 : index
    %51 = vector.load %arg5[%c0_19, %c0_20] : memref<8x128xf32, #tpu.memory_space<vmem>>, vector<8x128xf32>
    tpu.vector_store %arg5[%c0_19, %c0_20], %50 {strides = array<i32>} : memref<8x128xf32, #tpu.memory_space<vmem>>, vector<8x128xf32>,
    return
  }
  func.func @transform_0(%arg0: i32) -> (i32, i32) {
    %c0_i32 = arith.constant 0 : i32
    %c0_i32_0 = arith.constant 0 : i32
    %c0_i32_1 = arith.constant 0 : i32
    return %c0_i32, %c0_i32_0 : i32, i32
  }
  func.func @transform_1(%arg0: i32) -> (i32, i32) {
    %c0_i32 = arith.constant 0 : i32
    %c0_i32_0 = arith.constant 0 : i32
    %c0_i32_1 = arith.constant 0 : i32
    return %c0_i32, %c0_i32_0 : i32, i32
  }
  func.func @transform_2(%arg0: i32) -> (i32, i32) {
    %c0_i32 = arith.constant 0 : i32
    %c0_i32_0 = arith.constant 0 : i32
    %c0_i32_1 = arith.constant 0 : i32
    return %c0_i32, %c0_i32_0 : i32, i32
  }
  func.func @transform_3(%arg0: i32) -> (i32, i32) {
    %c0_i32 = arith.constant 0 : i32
    %c0_i32_0 = arith.constant 0 : i32
    return %c0_i32, %arg0 : i32, i32
  }
  func.func @transform_4(%arg0: i32) -> (i32, i32) {
    %c0_i32 = arith.constant 0 : i32
    %c0_i32_0 = arith.constant 0 : i32
    return %c0_i32, %arg0 : i32, i32
  }
}

</mosaic_0001>

<llo_original>
// kernel: tpu_custom_call.1
$region0: #{tpu_custom_call.1}
  #allocation0 [shape = 'u32[]', space=smem, size = 0x4, offset = 0x4, fixed_abs, tag = 'smem constant byte address 0x4 - core index']
  #allocation1 [shape = 'u32[144,128]{1,0:T(1,128)}', space=vmem, size = 0x12000, scoped, tag = 'internal scratch']
  %s0 = inlined_call_operand.vmem [shape: s32[256,1], index: 0, kind: input, shape index: {}]
  %s1 = inlined_call_operand.vmem [shape: s32[1,256], index: 1, kind: input, shape index: {}]
  %s2 = inlined_call_operand.vmem [shape: f32[3,256], index: 2, kind: input, shape index: {}]
  %s3 = inlined_call_operand.vmem [shape: f32[8,128], index: 3, kind: input, shape index: {}]
  %s4 = inlined_call_operand.hbm [shape: f32[8,128], index: 4, kind: output, shape index: {}]
  %s5 = sld [smem:[#allocation0]]
  $region26: #{tpu_custom_call.1} parent=0
    _
  %s7 = ssub.s32 1, %s5
  %s8 = scalar_select 0, %s7, %s5
  $region1: #{tpu_custom_call.1} parent=0
    #allocation2 [shape = 'u8[4096]{0}', space=vmem, size = 0x1000, scoped, tag = 'output window, operand 0, single buffered']
    #allocation3 [shape = 's32[1]{0}', space=sflag, size = 0x4, scoped, tag = 'scoped memory for tpu_custom_call.1']
    %9 = vsyncpa [#allocation3], 0
    // Predicated region
    $region2: #{tpu_custom_call.1} parent=1 // pred_check
      _
    $region3: #{tpu_custom_call.1} parent=1 // pred_check_branch
      %11 = sbr.rel (0) target = $region5
    $region4: #{tpu_custom_call.1} parent=1 // pred_region
      _
    $region5: #{tpu_custom_call.1} parent=1 // pred_fallthru
      _
    // Predicated region
    $region6: #{tpu_custom_call.1} parent=1 // pred_check
      _
    $region7: #{tpu_custom_call.1} parent=1 // pred_check_branch
      %13 = sbr.rel (0) target = $region9
    $region8: #{tpu_custom_call.1} parent=1 // pred_region
      _
    $region9: #{tpu_custom_call.1} parent=1 // pred_fallthru
      _
    // Predicated region
    $region10: #{tpu_custom_call.1} parent=1 // pred_check
      _
    $region11: #{tpu_custom_call.1} parent=1 // pred_check_branch
      %15 = sbr.rel (0) target = $region13
    $region12: #{tpu_custom_call.1} parent=1 // pred_region
      _
    $region13: #{tpu_custom_call.1} parent=1 // pred_fallthru
      _
    // Predicated region
    $region14: #{tpu_custom_call.1} parent=1 // pred_check
      _
    $region15: #{tpu_custom_call.1} parent=1 // pred_check_branch
      %17 = sbr.rel (0) target = $region17
    $region16: #{tpu_custom_call.1} parent=1 // pred_region
      _
    $region17: #{tpu_custom_call.1} parent=1 // pred_fallthru
      _
    %v19 = vlaneseq
    %v20 = vand.u32 %v19, 127
    %v21 = vld [vmem:[%s0] sm:$0xff]
    %v22 = vld [vmem:[%s0 + $0x8] sm:$0xff]
    %v23 = vld [vmem:[%s0 + $0x10] sm:$0xff]
    %v24 = vld [vmem:[%s0 + $0x18] sm:$0xff]
    %v25 = vld [vmem:[%s0 + $0x20] sm:$0xff]
    %v26 = vld [vmem:[%s0 + $0x28] sm:$0xff]
    %v27 = vld [vmem:[%s0 + $0x30] sm:$0xff]
    %v28 = vld [vmem:[%s0 + $0x38] sm:$0xff]
    %v29 = vld [vmem:[%s0 + $0x40] sm:$0xff]
    %v30 = vld [vmem:[%s0 + $0x48] sm:$0xff]
    %v31 = vld [vmem:[%s0 + $0x50] sm:$0xff]
    %v32 = vld [vmem:[%s0 + $0x58] sm:$0xff]
    %v33 = vld [vmem:[%s0 + $0x60] sm:$0xff]
    %v34 = vld [vmem:[%s0 + $0x68] sm:$0xff]
    %v35 = vld [vmem:[%s0 + $0x70] sm:$0xff]
    %v36 = vld [vmem:[%s0 + $0x78] sm:$0xff]
    %v37 = vld [vmem:[%s0 + $0x80] sm:$0xff]
    %v38 = vld [vmem:[%s0 + $0x88] sm:$0xff]
    %v39 = vld [vmem:[%s0 + $0x90] sm:$0xff]
    %v40 = vld [vmem:[%s0 + $0x98] sm:$0xff]
    %v41 = vld [vmem:[%s0 + $0xa0] sm:$0xff]
    %v42 = vld [vmem:[%s0 + $0xa8] sm:$0xff]
    %v43 = vld [vmem:[%s0 + $0xb0] sm:$0xff]
    %v44 = vld [vmem:[%s0 + $0xb8] sm:$0xff]
    %v45 = vld [vmem:[%s0 + $0xc0] sm:$0xff]
    %v46 = vld [vmem:[%s0 + $0xc8] sm:$0xff]
    %v47 = vld [vmem:[%s0 + $0xd0] sm:$0xff]
    %v48 = vld [vmem:[%s0 + $0xd8] sm:$0xff]
    %v49 = vld [vmem:[%s0 + $0xe0] sm:$0xff]
    %v50 = vld [vmem:[%s0 + $0xe8] sm:$0xff]
    %v51 = vld [vmem:[%s0 + $0xf0] sm:$0xff]
    %v52 = vld [vmem:[%s0 + $0xf8] sm:$0xff]
    %53 = vset.pattern.permute.xlu0 0
    %54 = vperm.xlu0 %53, %v21
    %v55 = vpop.permute.xlu0 %54
    %56 = vset.pattern.permute.xlu0 0
    %57 = vperm.xlu0 %56, %v22
    %v58 = vpop.permute.xlu0 %57
    %59 = vset.pattern.permute.xlu0 0
    %60 = vperm.xlu0 %59, %v23
    %v61 = vpop.permute.xlu0 %60
    %62 = vset.pattern.permute.xlu0 0
    %63 = vperm.xlu0 %62, %v24
    %v64 = vpop.permute.xlu0 %63
    %65 = vset.pattern.permute.xlu0 0
    %66 = vperm.xlu0 %65, %v25
    %v67 = vpop.permute.xlu0 %66
    %68 = vset.pattern.permute.xlu0 0
    %69 = vperm.xlu0 %68, %v26
    %v70 = vpop.permute.xlu0 %69
    %71 = vset.pattern.permute.xlu0 0
    %72 = vperm.xlu0 %71, %v27
    %v73 = vpop.permute.xlu0 %72
    %74 = vset.pattern.permute.xlu0 0
    %75 = vperm.xlu0 %74, %v28
    %v76 = vpop.permute.xlu0 %75
    %77 = vset.pattern.permute.xlu0 0
    %78 = vperm.xlu0 %77, %v29
    %v79 = vpop.permute.xlu0 %78
    %80 = vset.pattern.permute.xlu0 0
    %81 = vperm.xlu0 %80, %v30
    %v82 = vpop.permute.xlu0 %81
    %83 = vset.pattern.permute.xlu0 0
    %84 = vperm.xlu0 %83, %v31
    %v85 = vpop.permute.xlu0 %84
    %86 = vset.pattern.permute.xlu0 0
    %87 = vperm.xlu0 %86, %v32
    %v88 = vpop.permute.xlu0 %87
    %89 = vset.pattern.permute.xlu0 0
    %90 = vperm.xlu0 %89, %v33
    %v91 = vpop.permute.xlu0 %90
    %92 = vset.pattern.permute.xlu0 0
    %93 = vperm.xlu0 %92, %v34
    %v94 = vpop.permute.xlu0 %93
    %95 = vset.pattern.permute.xlu0 0
    %96 = vperm.xlu0 %95, %v35
    %v97 = vpop.permute.xlu0 %96
    %98 = vset.pattern.permute.xlu0 0
    %99 = vperm.xlu0 %98, %v36
    %v100 = vpop.permute.xlu0 %99
    %101 = vset.pattern.permute.xlu0 0
    %102 = vperm.xlu0 %101, %v37
    %v103 = vpop.permute.xlu0 %102
    %104 = vset.pattern.permute.xlu0 0
    %105 = vperm.xlu0 %104, %v38
    %v106 = vpop.permute.xlu0 %105
    %107 = vset.pattern.permute.xlu0 0
    %108 = vperm.xlu0 %107, %v39
    %v109 = vpop.permute.xlu0 %108
    %110 = vset.pattern.permute.xlu0 0
    %111 = vperm.xlu0 %110, %v40
    %v112 = vpop.permute.xlu0 %111
    %113 = vset.pattern.permute.xlu0 0
    %114 = vperm.xlu0 %113, %v41
    %v115 = vpop.permute.xlu0 %114
    %116 = vset.pattern.permute.xlu0 0
    %117 = vperm.xlu0 %116, %v42
    %v118 = vpop.permute.xlu0 %117
    %119 = vset.pattern.permute.xlu0 0
    %120 = vperm.xlu0 %119, %v43
    %v121 = vpop.permute.xlu0 %120
    %122 = vset.pattern.permute.xlu0 0
    %123 = vperm.xlu0 %122, %v44
    %v124 = vpop.permute.xlu0 %123
    %125 = vset.pattern.permute.xlu0 0
    %126 = vperm.xlu0 %125, %v45
    %v127 = vpop.permute.xlu0 %126
    %128 = vset.pattern.permute.xlu0 0
    %129 = vperm.xlu0 %128, %v46
    %v130 = vpop.permute.xlu0 %129
    %131 = vset.pattern.permute.xlu0 0
    %132 = vperm.xlu0 %131, %v47
    %v133 = vpop.permute.xlu0 %132
    %134 = vset.pattern.permute.xlu0 0
    %135 = vperm.xlu0 %134, %v48
    %v136 = vpop.permute.xlu0 %135
    %137 = vset.pattern.permute.xlu0 0
    %138 = vperm.xlu0 %137, %v49
    %v139 = vpop.permute.xlu0 %138
    %140 = vset.pattern.permute.xlu0 0
    %141 = vperm.xlu0 %140, %v50
    %v142 = vpop.permute.xlu0 %141
    %143 = vset.pattern.permute.xlu0 0
    %144 = vperm.xlu0 %143, %v51
    %v145 = vpop.permute.xlu0 %144
    %146 = vset.pattern.permute.xlu0 0
    %147 = vperm.xlu0 %146, %v52
    %v148 = vpop.permute.xlu0 %147
    %vm149 = vcmp.eq.s32.totalorder %v20, %v55
    %vm150 = vcmp.eq.s32.totalorder %v20, %v58
    %vm151 = vcmp.eq.s32.totalorder %v20, %v61
    %vm152 = vcmp.eq.s32.totalorder %v20, %v64
    %vm153 = vcmp.eq.s32.totalorder %v20, %v67
    %vm154 = vcmp.eq.s32.totalorder %v20, %v70
    %vm155 = vcmp.eq.s32.totalorder %v20, %v73
    %vm156 = vcmp.eq.s32.totalorder %v20, %v76
    %vm157 = vcmp.eq.s32.totalorder %v20, %v79
    %vm158 = vcmp.eq.s32.totalorder %v20, %v82
    %vm159 = vcmp.eq.s32.totalorder %v20, %v85
    %vm160 = vcmp.eq.s32.totalorder %v20, %v88
    %vm161 = vcmp.eq.s32.totalorder %v20, %v91
    %vm162 = vcmp.eq.s32.totalorder %v20, %v94
    %vm163 = vcmp.eq.s32.totalorder %v20, %v97
    %vm164 = vcmp.eq.s32.totalorder %v20, %v100
    %vm165 = vcmp.eq.s32.totalorder %v20, %v103
    %vm166 = vcmp.eq.s32.totalorder %v20, %v106
    %vm167 = vcmp.eq.s32.totalorder %v20, %v109
    %vm168 = vcmp.eq.s32.totalorder %v20, %v112
    %vm169 = vcmp.eq.s32.totalorder %v20, %v115
    %vm170 = vcmp.eq.s32.totalorder %v20, %v118
    %vm171 = vcmp.eq.s32.totalorder %v20, %v121
    %vm172 = vcmp.eq.s32.totalorder %v20, %v124
    %vm173 = vcmp.eq.s32.totalorder %v20, %v127
    %vm174 = vcmp.eq.s32.totalorder %v20, %v130
    %vm175 = vcmp.eq.s32.totalorder %v20, %v133
    %vm176 = vcmp.eq.s32.totalorder %v20, %v136
    %vm177 = vcmp.eq.s32.totalorder %v20, %v139
    %vm178 = vcmp.eq.s32.totalorder %v20, %v142
    %vm179 = vcmp.eq.s32.totalorder %v20, %v145
    %vm180 = vcmp.eq.s32.totalorder %v20, %v148
    %v181 = vsel %vm149, 1, 0
    %v182 = vsel %vm150, 1, 0
    %v183 = vsel %vm151, 1, 0
    %v184 = vsel %vm152, 1, 0
    %v185 = vsel %vm153, 1, 0
    %v186 = vsel %vm154, 1, 0
    %v187 = vsel %vm155, 1, 0
    %v188 = vsel %vm156, 1, 0
    %v189 = vsel %vm157, 1, 0
    %v190 = vsel %vm158, 1, 0
    %v191 = vsel %vm159, 1, 0
    %v192 = vsel %vm160, 1, 0
    %v193 = vsel %vm161, 1, 0
    %v194 = vsel %vm162, 1, 0
    %v195 = vsel %vm163, 1, 0
    %v196 = vsel %vm164, 1, 0
    %v197 = vsel %vm165, 1, 0
    %v198 = vsel %vm166, 1, 0
    %v199 = vsel %vm167, 1, 0
    %v200 = vsel %vm168, 1, 0
    %v201 = vsel %vm169, 1, 0
    %v202 = vsel %vm170, 1, 0
    %v203 = vsel %vm171, 1, 0
    %v204 = vsel %vm172, 1, 0
    %v205 = vsel %vm173, 1, 0
    %v206 = vsel %vm174, 1, 0
    %v207 = vsel %vm175, 1, 0
    %v208 = vsel %vm176, 1, 0
    %v209 = vsel %vm177, 1, 0
    %v210 = vsel %vm178, 1, 0
    %v211 = vsel %vm179, 1, 0
    %v212 = vsel %vm180, 1, 0
    %v213 = vcvt.s32.f32 %v181
    %v214 = vcvt.s32.f32 %v182
    %v215 = vcvt.s32.f32 %v183
    %v216 = vcvt.s32.f32 %v184
    %v217 = vcvt.s32.f32 %v185
    %v218 = vcvt.s32.f32 %v186
    %v219 = vcvt.s32.f32 %v187
    %v220 = vcvt.s32.f32 %v188
    %v221 = vcvt.s32.f32 %v189
    %v222 = vcvt.s32.f32 %v190
    %v223 = vcvt.s32.f32 %v191
    %v224 = vcvt.s32.f32 %v192
    %v225 = vcvt.s32.f32 %v193
    %v226 = vcvt.s32.f32 %v194
    %v227 = vcvt.s32.f32 %v195
    %v228 = vcvt.s32.f32 %v196
    %v229 = vcvt.s32.f32 %v197
    %v230 = vcvt.s32.f32 %v198
    %v231 = vcvt.s32.f32 %v199
    %v232 = vcvt.s32.f32 %v200
    %v233 = vcvt.s32.f32 %v201
    %v234 = vcvt.s32.f32 %v202
    %v235 = vcvt.s32.f32 %v203
    %v236 = vcvt.s32.f32 %v204
    %v237 = vcvt.s32.f32 %v205
    %v238 = vcvt.s32.f32 %v206
    %v239 = vcvt.s32.f32 %v207
    %v240 = vcvt.s32.f32 %v208
    %v241 = vcvt.s32.f32 %v209
    %v242 = vcvt.s32.f32 %v210
    %v243 = vcvt.s32.f32 %v211
    %v244 = vcvt.s32.f32 %v212
    %v245 = vpack.c.bf16 %v214, %v213
    %v246 = vpack.c.bf16 %v216, %v215
    %v247 = vpack.c.bf16 %v218, %v217
    %v248 = vpack.c.bf16 %v220, %v219
    %v249 = vpack.c.bf16 %v222, %v221
    %v250 = vpack.c.bf16 %v224, %v223
    %v251 = vpack.c.bf16 %v226, %v225
    %v252 = vpack.c.bf16 %v228, %v227
    %v253 = vpack.c.bf16 %v230, %v229
    %v254 = vpack.c.bf16 %v232, %v231
    %v255 = vpack.c.bf16 %v234, %v233
    %v256 = vpack.c.bf16 %v236, %v235
    %v257 = vpack.c.bf16 %v238, %v237
    %v258 = vpack.c.bf16 %v240, %v239
    %v259 = vpack.c.bf16 %v242, %v241
    %v260 = vpack.c.bf16 %v244, %v243
    %v261 = vlaneseq
    %v262 = vshrl.u32 %v261, 7
    %v263 = vld [vmem:[%s1] sm:$0x3]
    %v264 = vlaneseq
    %v265 = vshrl.u32 %v264, 7
    %v266 = vsub.s32 0, %v265
    %v267 = vrot.slane %v263, %v266
    %v268 = vlaneseq
    %v269 = vshrl.u32 %v268, 7
    %v270 = vsub.s32 1, %v269
    %v271 = vrot.slane %v263, %v270
    %vm272 = vcmp.eq.s32.totalorder %v262, %v267
    %vm273 = vcmp.eq.s32.totalorder %v262, %v271
    %v274 = vld [vmem:[%s3] sm:$0xff]
    %v275 = vpack.c.bf16 %v274, %v274
    %vm276 = vcmask 64512
    %v278 = vsel %vm276, %v245, 0
    %v281 = vsel %vm276, %v246, 0
    %v284 = vsel %vm276, %v247, 0
    %v287 = vsel %vm276, %v248, 0
    %v290 = vsel %vm276, %v249, 0
    %v293 = vsel %vm276, %v250, 0
    %v296 = vsel %vm276, %v251, 0
    %v299 = vsel %vm276, %v252, 0
    %v302 = vsel %vm276, %v253, 0
    %v305 = vsel %vm276, %v254, 0
    %v308 = vsel %vm276, %v255, 0
    %v311 = vsel %vm276, %v256, 0
    %v314 = vsel %vm276, %v257, 0
    %v317 = vsel %vm276, %v258, 0
    %v320 = vsel %vm276, %v259, 0
    %v323 = vsel %vm276, %v260, 0
    %vm325 = vcmask 1043456
    %v327 = vsel %vm325, %v275, 0
    %329 = vmatprep.subr.bf16.mxu0 0
    %330 = vmatpush1.bf16.msra.mxu0 %v327
    %331 = vmatprep.subr.bf16.mxu0 0
    %332 = vmatpush1.bf16.msra.mxu0 0
    %333 = vmatprep.subr.bf16.mxu0 0
    %334 = vmatpush1.bf16.msra.mxu0 0
    %335 = vmatprep.subr.bf16.mxu0 0
    %336 = vmatpush1.bf16.msra.mxu0 0
    %337 = vmatprep.subr.bf16.mxu0 0
    %338 = vmatpush1.bf16.msra.mxu0 0
    %339 = vmatprep.subr.bf16.mxu0 0
    %340 = vmatpush1.bf16.msra.mxu0 0
    %341 = vmatprep.subr.bf16.mxu0 0
    %342 = vmatpush1.bf16.msra.mxu0 0
    %343 = vmatprep.subr.bf16.mxu0 0
    %344 = vmatpush1.bf16.msra.mxu0 0
    %345 = vmatprep.subr.bf16.mxu0 0
    %346 = vmatpush1.bf16.msra.mxu0 0
    %347 = vmatprep.subr.bf16.mxu0 0
    %348 = vmatpush1.bf16.msra.mxu0 0
    %349 = vmatprep.subr.bf16.mxu0 0
    %350 = vmatpush1.bf16.msra.mxu0 0
    %351 = vmatprep.subr.bf16.mxu0 0
    %352 = vmatpush1.bf16.msra.mxu0 0
    %353 = vmatprep.subr.bf16.mxu0 0
    %354 = vmatpush1.bf16.msra.mxu0 0
    %355 = vmatprep.subr.bf16.mxu0 0
    %356 = vmatpush1.bf16.msra.mxu0 0
    %357 = vmatprep.subr.bf16.mxu0 0
    %358 = vmatpush1.bf16.msra.mxu0 0
    %359 = vmatprep.subr.bf16.mxu0 0
    %360 = vmatpush1.bf16.msra.mxu0 0
    %361 = vmatprep.mubr.bf16.mxu0 0
    %362 = vmatmul.mubr.bf16.gmra.mrb[0].mxu0 %v278
    %v363 = vpop.f32.mrb[0].mxu0
    %v364 = vadd.f32 0.0, %v363
    %v365 = vpop.f32.mrb[0].mxu0
    %v366 = vpop.f32.mrb[0].mxu0
    %v367 = vadd.f32 0.0, %v366
    %v368 = vpop.f32.mrb[0].mxu0
    %369 = vmatprep.mubr.bf16.mxu0 0
    %370 = vmatmul.mubr.bf16.gmra.mrb[0].mxu0 %v281
    %v371 = vpop.f32.mrb[0].mxu0
    %v372 = vadd.f32 0.0, %v371
    %v373 = vpop.f32.mrb[0].mxu0
    %v374 = vpop.f32.mrb[0].mxu0
    %v375 = vadd.f32 0.0, %v374
    %v376 = vpop.f32.mrb[0].mxu0
    %377 = vmatprep.mubr.bf16.mxu0 0
    %378 = vmatmul.mubr.bf16.gmra.mrb[0].mxu0 %v284
    %v379 = vpop.f32.mrb[0].mxu0
    %v380 = vadd.f32 0.0, %v379
    %v381 = vpop.f32.mrb[0].mxu0
    %v382 = vpop.f32.mrb[0].mxu0
    %v383 = vadd.f32 0.0, %v382
    %v384 = vpop.f32.mrb[0].mxu0
    %385 = vmatprep.mubr.bf16.mxu0 0
    %386 = vmatmul.mubr.bf16.gmra.mrb[0].mxu0 %v287
    %v387 = vpop.f32.mrb[0].mxu0
    %v388 = vadd.f32 0.0, %v387
    %v389 = vpop.f32.mrb[0].mxu0
    %v390 = vpop.f32.mrb[0].mxu0
    %v391 = vadd.f32 0.0, %v390
    %v392 = vpop.f32.mrb[0].mxu0
    %393 = vmatprep.mubr.bf16.mxu0 0
    %394 = vmatmul.mubr.bf16.gmra.mrb[0].mxu0 %v290
    %v395 = vpop.f32.mrb[0].mxu0
    %v396 = vadd.f32 0.0, %v395
    %v397 = vpop.f32.mrb[0].mxu0
    %v398 = vpop.f32.mrb[0].mxu0
    %v399 = vadd.f32 0.0, %v398
    %v400 = vpop.f32.mrb[0].mxu0
    %401 = vmatprep.mubr.bf16.mxu0 0
    %402 = vmatmul.mubr.bf16.gmra.mrb[0].mxu0 %v293
    %v403 = vpop.f32.mrb[0].mxu0
    %v404 = vadd.f32 0.0, %v403
    %v405 = vpop.f32.mrb[0].mxu0
    %v406 = vpop.f32.mrb[0].mxu0
    %v407 = vadd.f32 0.0, %v406
    %v408 = vpop.f32.mrb[0].mxu0
    %409 = vmatprep.mubr.bf16.mxu0 0
    %410 = vmatmul.mubr.bf16.gmra.mrb[0].mxu0 %v296
    %v411 = vpop.f32.mrb[0].mxu0
    %v412 = vadd.f32 0.0, %v411
    %v413 = vpop.f32.mrb[0].mxu0
    %v414 = vpop.f32.mrb[0].mxu0
    %v415 = vadd.f32 0.0, %v414
    %v416 = vpop.f32.mrb[0].mxu0
    %417 = vmatprep.mubr.bf16.mxu0 0
    %418 = vmatmul.mubr.bf16.gmra.mrb[0].mxu0 %v299
    %v419 = vpop.f32.mrb[0].mxu0
    %v420 = vadd.f32 0.0, %v419
    %v421 = vpop.f32.mrb[0].mxu0
    %v422 = vpop.f32.mrb[0].mxu0
    %v423 = vadd.f32 0.0, %v422
    %v424 = vpop.f32.mrb[0].mxu0
    %425 = vmatprep.mubr.bf16.mxu0 0
    %426 = vmatmul.mubr.bf16.gmra.mrb[0].mxu0 %v302
    %v427 = vpop.f32.mrb[0].mxu0
    %v428 = vadd.f32 0.0, %v427
    %v429 = vpop.f32.mrb[0].mxu0
    %v430 = vpop.f32.mrb[0].mxu0
    %v431 = vadd.f32 0.0, %v430
    %v432 = vpop.f32.mrb[0].mxu0
    %433 = vmatprep.mubr.bf16.mxu0 0
    %434 = vmatmul.mubr.bf16.gmra.mrb[0].mxu0 %v305
    %v435 = vpop.f32.mrb[0].mxu0
    %v436 = vadd.f32 0.0, %v435
    %v437 = vpop.f32.mrb[0].mxu0
    %v438 = vpop.f32.mrb[0].mxu0
    %v439 = vadd.f32 0.0, %v438
    %v440 = vpop.f32.mrb[0].mxu0
    %441 = vmatprep.mubr.bf16.mxu0 0
    %442 = vmatmul.mubr.bf16.gmra.mrb[0].mxu0 %v308
    %v443 = vpop.f32.mrb[0].mxu0
    %v444 = vadd.f32 0.0, %v443
    %v445 = vpop.f32.mrb[0].mxu0
    %v446 = vpop.f32.mrb[0].mxu0
    %v447 = vadd.f32 0.0, %v446
    %v448 = vpop.f32.mrb[0].mxu0
    %449 = vmatprep.mubr.bf16.mxu0 0
    %450 = vmatmul.mubr.bf16.gmra.mrb[0].mxu0 %v311
    %v451 = vpop.f32.mrb[0].mxu0
    %v452 = vadd.f32 0.0, %v451
    %v453 = vpop.f32.mrb[0].mxu0
    %v454 = vpop.f32.mrb[0].mxu0
    %v455 = vadd.f32 0.0, %v454
    %v456 = vpop.f32.mrb[0].mxu0
    %457 = vmatprep.mubr.bf16.mxu0 0
    %458 = vmatmul.mubr.bf16.gmra.mrb[0].mxu0 %v314
    %v459 = vpop.f32.mrb[0].mxu0
    %v460 = vadd.f32 0.0, %v459
    %v461 = vpop.f32.mrb[0].mxu0
    %v462 = vpop.f32.mrb[0].mxu0
    %v463 = vadd.f32 0.0, %v462
    %v464 = vpop.f32.mrb[0].mxu0
    %465 = vmatprep.mubr.bf16.mxu0 0
    %466 = vmatmul.mubr.bf16.gmra.mrb[0].mxu0 %v317
    %v467 = vpop.f32.mrb[0].mxu0
    %v468 = vadd.f32 0.0, %v467
    %v469 = vpop.f32.mrb[0].mxu0
    %v470 = vpop.f32.mrb[0].mxu0
    %v471 = vadd.f32 0.0, %v470
    %v472 = vpop.f32.mrb[0].mxu0
    %473 = vmatprep.mubr.bf16.mxu0 0
    %474 = vmatmul.mubr.bf16.gmra.mrb[0].mxu0 %v320
    %v475 = vpop.f32.mrb[0].mxu0
    %v476 = vadd.f32 0.0, %v475
    %v477 = vpop.f32.mrb[0].mxu0
    %v478 = vpop.f32.mrb[0].mxu0
    %v479 = vadd.f32 0.0, %v478
    %v480 = vpop.f32.mrb[0].mxu0
    %481 = vmatprep.mubr.bf16.mxu0 0
    %482 = vmatmul.mubr.bf16.gmra.mrb[0].mxu0 %v323
    %v483 = vpop.f32.mrb[0].mxu0
    %v484 = vadd.f32 0.0, %v483
    %v485 = vpop.f32.mrb[0].mxu0
    %v486 = vpop.f32.mrb[0].mxu0
    %v487 = vadd.f32 0.0, %v486
    %v488 = vpop.f32.mrb[0].mxu0
    %489 = vdwg.mxu0
    %v490 = vld [vmem:[%s2] ss:$4 sm:$0x3]
    %v492 = vlaneseq
    %v493 = vshrl.u32 %v492, 7
    %v494 = vsub.s32 0, %v493
    %v495 = vrot.slane %v490, %v494
    %v496 = vlaneseq
    %v497 = vshrl.u32 %v496, 7
    %v498 = vsub.s32 1, %v497
    %v499 = vrot.slane %v490, %v498
    %v502 = vsel %vm272, %v495, 0.0
    %v503 = vsel %vm273, %v499, 0.0
    %v504 = vpack.c.bf16 %v502, %v502
    %v505 = vpack.c.bf16 %v503, %v503
    %v506 = vpack.c.bf16 %v367, %v364
    %v507 = vpack.c.bf16 %v375, %v372
    %v508 = vpack.c.bf16 %v383, %v380
    %v509 = vpack.c.bf16 %v391, %v388
    %v510 = vpack.c.bf16 %v399, %v396
    %v511 = vpack.c.bf16 %v407, %v404
    %v512 = vpack.c.bf16 %v415, %v412
    %v513 = vpack.c.bf16 %v423, %v420
    %v514 = vpack.c.bf16 %v431, %v428
    %v515 = vpack.c.bf16 %v439, %v436
    %v516 = vpack.c.bf16 %v447, %v444
    %v517 = vpack.c.bf16 %v455, %v452
    %v518 = vpack.c.bf16 %v463, %v460
    %v519 = vpack.c.bf16 %v471, %v468
    %v520 = vpack.c.bf16 %v479, %v476
    %v521 = vpack.c.bf16 %v487, %v484
    %522 = vmatprep.subr.bf16.mxu0 0
    %523 = vmatpush1.bf16.msra.mxu0 %v506
    %524 = vmatprep.subr.bf16.mxu0 0
    %525 = vmatpush1.bf16.msra.mxu0 %v507
    %526 = vmatprep.subr.bf16.mxu0 0
    %527 = vmatpush1.bf16.msra.mxu0 %v508
    %528 = vmatprep.subr.bf16.mxu0 0
    %529 = vmatpush1.bf16.msra.mxu0 %v509
    %530 = vmatprep.subr.bf16.mxu0 0
    %531 = vmatpush1.bf16.msra.mxu0 %v510
    %532 = vmatprep.subr.bf16.mxu0 0
    %533 = vmatpush1.bf16.msra.mxu0 %v511
    %534 = vmatprep.subr.bf16.mxu0 0
    %535 = vmatpush1.bf16.msra.mxu0 %v512
    %536 = vmatprep.subr.bf16.mxu0 0
    %537 = vmatpush1.bf16.msra.mxu0 %v513
    %538 = vmatprep.subr.bf16.mxu0 0
    %539 = vmatpush1.bf16.msra.mxu0 %v514
    %540 = vmatprep.subr.bf16.mxu0 0
    %541 = vmatpush1.bf16.msra.mxu0 %v515
    %542 = vmatprep.subr.bf16.mxu0 0
    %543 = vmatpush1.bf16.msra.mxu0 %v516
    %544 = vmatprep.subr.bf16.mxu0 0
    %545 = vmatpush1.bf16.msra.mxu0 %v517
    %546 = vmatprep.subr.bf16.mxu0 0
    %547 = vmatpush1.bf16.msra.mxu0 %v518
    %548 = vmatprep.subr.bf16.mxu0 0
    %549 = vmatpush1.bf16.msra.mxu0 %v519
    %550 = vmatprep.subr.bf16.mxu0 0
    %551 = vmatpush1.bf16.msra.mxu0 %v520
    %552 = vmatprep.subr.bf16.mxu0 0
    %553 = vmatpush1.bf16.msra.mxu0 %v521
    %554 = vmatprep.mubr.bf16.mxu0 %v505
    %555 = vmatmul.mubr.bf16.gmra.mrb[0].mxu0 %v504
    %v556 = vpop.f32.mrb[0].mxu0
    %v557 = vadd.f32 %v274, %v556
    %v558 = vpop.f32.mrb[0].mxu0
    %v559 = vpop.f32.mrb[0].mxu0
    %v560 = vpop.f32.mrb[0].mxu0
    %561 = vdwg.mxu0
    %v562 = vpack.c.bf16 %v557, %v557
    %v564 = vsel %vm325, %v562, 0
    %566 = vmatprep.subr.bf16.mxu0 0
    %567 = vmatpush1.bf16.msra.mxu0 %v564
    %568 = vmatprep.subr.bf16.mxu0 0
    %569 = vmatpush1.bf16.msra.mxu0 0
    %570 = vmatprep.subr.bf16.mxu0 0
    %571 = vmatpush1.bf16.msra.mxu0 0
    %572 = vmatprep.subr.bf16.mxu0 0
    %573 = vmatpush1.bf16.msra.mxu0 0
    %574 = vmatprep.subr.bf16.mxu0 0
    %575 = vmatpush1.bf16.msra.mxu0 0
    %576 = vmatprep.subr.bf16.mxu0 0
    %577 = vmatpush1.bf16.msra.mxu0 0
    %578 = vmatprep.subr.bf16.mxu0 0
    %579 = vmatpush1.bf16.msra.mxu0 0
    %580 = vmatprep.subr.bf16.mxu0 0
    %581 = vmatpush1.bf16.msra.mxu0 0
    %582 = vmatprep.subr.bf16.mxu0 0
    %583 = vmatpush1.bf16.msra.mxu0 0
    %584 = vmatprep.subr.bf16.mxu0 0
    %585 = vmatpush1.bf16.msra.mxu0 0
    %586 = vmatprep.subr.bf16.mxu0 0
    %587 = vmatpush1.bf16.msra.mxu0 0
    %588 = vmatprep.subr.bf16.mxu0 0
    %589 = vmatpush1.bf16.msra.mxu0 0
    %590 = vmatprep.subr.bf16.mxu0 0
    %591 = vmatpush1.bf16.msra.mxu0 0
    %592 = vmatprep.subr.bf16.mxu0 0
    %593 = vmatpush1.bf16.msra.mxu0 0
    %594 = vmatprep.subr.bf16.mxu0 0
    %595 = vmatpush1.bf16.msra.mxu0 0
    %596 = vmatprep.subr.bf16.mxu0 0
    %597 = vmatpush1.bf16.msra.mxu0 0
    %598 = vmatprep.mubr.bf16.mxu0 0
    %599 = vmatmul.mubr.bf16.gmra.mrb[0].mxu0 %v278
    %v600 = vpop.f32.mrb[0].mxu0
    %v601 = vadd.f32 0.0, %v600
    %v602 = vpop.f32.mrb[0].mxu0
    %v603 = vpop.f32.mrb[0].mxu0
    %v604 = vadd.f32 0.0, %v603
    %v605 = vpop.f32.mrb[0].mxu0
    %606 = vmatprep.mubr.bf16.mxu0 0
    %607 = vmatmul.mubr.bf16.gmra.mrb[0].mxu0 %v281
    %v608 = vpop.f32.mrb[0].mxu0
    %v609 = vadd.f32 0.0, %v608
    %v610 = vpop.f32.mrb[0].mxu0
    %v611 = vpop.f32.mrb[0].mxu0
    %v612 = vadd.f32 0.0, %v611
    %v613 = vpop.f32.mrb[0].mxu0
    %614 = vmatprep.mubr.bf16.mxu0 0
    %615 = vmatmul.mubr.bf16.gmra.mrb[0].mxu0 %v284
    %v616 = vpop.f32.mrb[0].mxu0
    %v617 = vadd.f32 0.0, %v616
    %v618 = vpop.f32.mrb[0].mxu0
    %v619 = vpop.f32.mrb[0].mxu0
    %v620 = vadd.f32 0.0, %v619
    %v621 = vpop.f32.mrb[0].mxu0
    %622 = vmatprep.mubr.bf16.mxu0 0
    %623 = vmatmul.mubr.bf16.gmra.mrb[0].mxu0 %v287
    %v624 = vpop.f32.mrb[0].mxu0
    %v625 = vadd.f32 0.0, %v624
    %v626 = vpop.f32.mrb[0].mxu0
    %v627 = vpop.f32.mrb[0].mxu0
    %v628 = vadd.f32 0.0, %v627
    %v629 = vpop.f32.mrb[0].mxu0
    %630 = vmatprep.mubr.bf16.mxu0 0
    %631 = vmatmul.mubr.bf16.gmra.mrb[0].mxu0 %v290
    %v632 = vpop.f32.mrb[0].mxu0
    %v633 = vadd.f32 0.0, %v632
    %v634 = vpop.f32.mrb[0].mxu0
    %v635 = vpop.f32.mrb[0].mxu0
    %v636 = vadd.f32 0.0, %v635
    %v637 = vpop.f32.mrb[0].mxu0
    %638 = vmatprep.mubr.bf16.mxu0 0
    %639 = vmatmul.mubr.bf16.gmra.mrb[0].mxu0 %v293
    %v640 = vpop.f32.mrb[0].mxu0
    %v641 = vadd.f32 0.0, %v640
    %v642 = vpop.f32.mrb[0].mxu0
    %v643 = vpop.f32.mrb[0].mxu0
    %v644 = vadd.f32 0.0, %v643
    %v645 = vpop.f32.mrb[0].mxu0
    %646 = vmatprep.mubr.bf16.mxu0 0
    %647 = vmatmul.mubr.bf16.gmra.mrb[0].mxu0 %v296
    %v648 = vpop.f32.mrb[0].mxu0
    %v649 = vadd.f32 0.0, %v648
    %v650 = vpop.f32.mrb[0].mxu0
    %v651 = vpop.f32.mrb[0].mxu0
    %v652 = vadd.f32 0.0, %v651
    %v653 = vpop.f32.mrb[0].mxu0
    %654 = vmatprep.mubr.bf16.mxu0 0
    %655 = vmatmul.mubr.bf16.gmra.mrb[0].mxu0 %v299
    %v656 = vpop.f32.mrb[0].mxu0
    %v657 = vadd.f32 0.0, %v656
    %v658 = vpop.f32.mrb[0].mxu0
    %v659 = vpop.f32.mrb[0].mxu0
    %v660 = vadd.f32 0.0, %v659
    %v661 = vpop.f32.mrb[0].mxu0
    %662 = vmatprep.mubr.bf16.mxu0 0
    %663 = vmatmul.mubr.bf16.gmra.mrb[0].mxu0 %v302
    %v664 = vpop.f32.mrb[0].mxu0
    %v665 = vadd.f32 0.0, %v664
    %v666 = vpop.f32.mrb[0].mxu0
    %v667 = vpop.f32.mrb[0].mxu0
    %v668 = vadd.f32 0.0, %v667
    %v669 = vpop.f32.mrb[0].mxu0
    %670 = vmatprep.mubr.bf16.mxu0 0
    %671 = vmatmul.mubr.bf16.gmra.mrb[0].mxu0 %v305
    %v672 = vpop.f32.mrb[0].mxu0
    %v673 = vadd.f32 0.0, %v672
    %v674 = vpop.f32.mrb[0].mxu0
    %v675 = vpop.f32.mrb[0].mxu0
    %v676 = vadd.f32 0.0, %v675
    %v677 = vpop.f32.mrb[0].mxu0
    %678 = vmatprep.mubr.bf16.mxu0 0
    %679 = vmatmul.mubr.bf16.gmra.mrb[0].mxu0 %v308
    %v680 = vpop.f32.mrb[0].mxu0
    %v681 = vadd.f32 0.0, %v680
    %v682 = vpop.f32.mrb[0].mxu0
    %v683 = vpop.f32.mrb[0].mxu0
    %v684 = vadd.f32 0.0, %v683
    %v685 = vpop.f32.mrb[0].mxu0
    %686 = vmatprep.mubr.bf16.mxu0 0
    %687 = vmatmul.mubr.bf16.gmra.mrb[0].mxu0 %v311
    %v688 = vpop.f32.mrb[0].mxu0
    %v689 = vadd.f32 0.0, %v688
    %v690 = vpop.f32.mrb[0].mxu0
    %v691 = vpop.f32.mrb[0].mxu0
    %v692 = vadd.f32 0.0, %v691
    %v693 = vpop.f32.mrb[0].mxu0
    %694 = vmatprep.mubr.bf16.mxu0 0
    %695 = vmatmul.mubr.bf16.gmra.mrb[0].mxu0 %v314
    %v696 = vpop.f32.mrb[0].mxu0
    %v697 = vadd.f32 0.0, %v696
    %v698 = vpop.f32.mrb[0].mxu0
    %v699 = vpop.f32.mrb[0].mxu0
    %v700 = vadd.f32 0.0, %v699
    %v701 = vpop.f32.mrb[0].mxu0
    %702 = vmatprep.mubr.bf16.mxu0 0
    %703 = vmatmul.mubr.bf16.gmra.mrb[0].mxu0 %v317
    %v704 = vpop.f32.mrb[0].mxu0
    %v705 = vadd.f32 0.0, %v704
    %v706 = vpop.f32.mrb[0].mxu0
    %v707 = vpop.f32.mrb[0].mxu0
    %v708 = vadd.f32 0.0, %v707
    %v709 = vpop.f32.mrb[0].mxu0
    %710 = vmatprep.mubr.bf16.mxu0 0
    %711 = vmatmul.mubr.bf16.gmra.mrb[0].mxu0 %v320
    %v712 = vpop.f32.mrb[0].mxu0
    %v713 = vadd.f32 0.0, %v712
    %v714 = vpop.f32.mrb[0].mxu0
    %v715 = vpop.f32.mrb[0].mxu0
    %v716 = vadd.f32 0.0, %v715
    %v717 = vpop.f32.mrb[0].mxu0
    %718 = vmatprep.mubr.bf16.mxu0 0
    %719 = vmatmul.mubr.bf16.gmra.mrb[0].mxu0 %v323
    %v720 = vpop.f32.mrb[0].mxu0
    %v721 = vadd.f32 0.0, %v720
    %v722 = vpop.f32.mrb[0].mxu0
    %v723 = vpop.f32.mrb[0].mxu0
    %v724 = vadd.f32 0.0, %v723
    %v725 = vpop.f32.mrb[0].mxu0
    %726 = vdwg.mxu0
    %s727 = scalar_lea.vmem %s2, 1
    %v728 = vld [vmem:[%s727] ss:$4 sm:$0x3]
    %v730 = vlaneseq
    %v731 = vshrl.u32 %v730, 7
    %v732 = vsub.s32 0, %v731
    %v733 = vrot.slane %v728, %v732
    %v734 = vlaneseq
    %v735 = vshrl.u32 %v734, 7
    %v736 = vsub.s32 1, %v735
    %v737 = vrot.slane %v728, %v736
    %v740 = vsel %vm272, %v733, 0.0
    %v741 = vsel %vm273, %v737, 0.0
    %v742 = vpack.c.bf16 %v740, %v740
    %v743 = vpack.c.bf16 %v741, %v741
    %v744 = vpack.c.bf16 %v604, %v601
    %v745 = vpack.c.bf16 %v612, %v609
    %v746 = vpack.c.bf16 %v620, %v617
    %v747 = vpack.c.bf16 %v628, %v625
    %v748 = vpack.c.bf16 %v636, %v633
    %v749 = vpack.c.bf16 %v644, %v641
    %v750 = vpack.c.bf16 %v652, %v649
    %v751 = vpack.c.bf16 %v660, %v657
    %v752 = vpack.c.bf16 %v668, %v665
    %v753 = vpack.c.bf16 %v676, %v673
    %v754 = vpack.c.bf16 %v684, %v681
    %v755 = vpack.c.bf16 %v692, %v689
    %v756 = vpack.c.bf16 %v700, %v697
    %v757 = vpack.c.bf16 %v708, %v705
    %v758 = vpack.c.bf16 %v716, %v713
    %v759 = vpack.c.bf16 %v724, %v721
    %760 = vmatprep.subr.bf16.mxu0 0
    %761 = vmatpush1.bf16.msra.mxu0 %v744
    %762 = vmatprep.subr.bf16.mxu0 0
    %763 = vmatpush1.bf16.msra.mxu0 %v745
    %764 = vmatprep.subr.bf16.mxu0 0
    %765 = vmatpush1.bf16.msra.mxu0 %v746
    %766 = vmatprep.subr.bf16.mxu0 0
    %767 = vmatpush1.bf16.msra.mxu0 %v747
    %768 = vmatprep.subr.bf16.mxu0 0
    %769 = vmatpush1.bf16.msra.mxu0 %v748
    %770 = vmatprep.subr.bf16.mxu0 0
    %771 = vmatpush1.bf16.msra.mxu0 %v749
    %772 = vmatprep.subr.bf16.mxu0 0
    %773 = vmatpush1.bf16.msra.mxu0 %v750
    %774 = vmatprep.subr.bf16.mxu0 0
    %775 = vmatpush1.bf16.msra.mxu0 %v751
    %776 = vmatprep.subr.bf16.mxu0 0
    %777 = vmatpush1.bf16.msra.mxu0 %v752
    %778 = vmatprep.subr.bf16.mxu0 0
    %779 = vmatpush1.bf16.msra.mxu0 %v753
    %780 = vmatprep.subr.bf16.mxu0 0
    %781 = vmatpush1.bf16.msra.mxu0 %v754
    %782 = vmatprep.subr.bf16.mxu0 0
    %783 = vmatpush1.bf16.msra.mxu0 %v755
    %784 = vmatprep.subr.bf16.mxu0 0
    %785 = vmatpush1.bf16.msra.mxu0 %v756
    %786 = vmatprep.subr.bf16.mxu0 0
    %787 = vmatpush1.bf16.msra.mxu0 %v757
    %788 = vmatprep.subr.bf16.mxu0 0
    %789 = vmatpush1.bf16.msra.mxu0 %v758
    %790 = vmatprep.subr.bf16.mxu0 0
    %791 = vmatpush1.bf16.msra.mxu0 %v759
    %792 = vmatprep.mubr.bf16.mxu0 %v743
    %793 = vmatmul.mubr.bf16.gmra.mrb[0].mxu0 %v742
    %v794 = vpop.f32.mrb[0].mxu0
    %v795 = vadd.f32 %v274, %v794
    %v796 = vpop.f32.mrb[0].mxu0
    %v797 = vpop.f32.mrb[0].mxu0
    %v798 = vpop.f32.mrb[0].mxu0
    %799 = vdwg.mxu0
    %v800 = vpack.c.bf16 %v795, %v795
    %v802 = vsel %vm325, %v800, 0
    %804 = vmatprep.subr.bf16.mxu0 0
    %805 = vmatpush1.bf16.msra.mxu0 %v802
    %806 = vmatprep.subr.bf16.mxu0 0
    %807 = vmatpush1.bf16.msra.mxu0 0
    %808 = vmatprep.subr.bf16.mxu0 0
    %809 = vmatpush1.bf16.msra.mxu0 0
    %810 = vmatprep.subr.bf16.mxu0 0
    %811 = vmatpush1.bf16.msra.mxu0 0
    %812 = vmatprep.subr.bf16.mxu0 0
    %813 = vmatpush1.bf16.msra.mxu0 0
    %814 = vmatprep.subr.bf16.mxu0 0
    %815 = vmatpush1.bf16.msra.mxu0 0
    %816 = vmatprep.subr.bf16.mxu0 0
    %817 = vmatpush1.bf16.msra.mxu0 0
    %818 = vmatprep.subr.bf16.mxu0 0
    %819 = vmatpush1.bf16.msra.mxu0 0
    %820 = vmatprep.subr.bf16.mxu0 0
    %821 = vmatpush1.bf16.msra.mxu0 0
    %822 = vmatprep.subr.bf16.mxu0 0
    %823 = vmatpush1.bf16.msra.mxu0 0
    %824 = vmatprep.subr.bf16.mxu0 0
    %825 = vmatpush1.bf16.msra.mxu0 0
    %826 = vmatprep.subr.bf16.mxu0 0
    %827 = vmatpush1.bf16.msra.mxu0 0
    %828 = vmatprep.subr.bf16.mxu0 0
    %829 = vmatpush1.bf16.msra.mxu0 0
    %830 = vmatprep.subr.bf16.mxu0 0
    %831 = vmatpush1.bf16.msra.mxu0 0
    %832 = vmatprep.subr.bf16.mxu0 0
    %833 = vmatpush1.bf16.msra.mxu0 0
    %834 = vmatprep.subr.bf16.mxu0 0
    %835 = vmatpush1.bf16.msra.mxu0 0
    %836 = vmatprep.mubr.bf16.mxu0 0
    %837 = vmatmul.mubr.bf16.gmra.mrb[0].mxu0 %v278
    %v838 = vpop.f32.mrb[0].mxu0
    %v839 = vadd.f32 0.0, %v838
    %v840 = vpop.f32.mrb[0].mxu0
    %v841 = vpop.f32.mrb[0].mxu0
    %v842 = vadd.f32 0.0, %v841
    %v843 = vpop.f32.mrb[0].mxu0
    %844 = vmatprep.mubr.bf16.mxu0 0
    %845 = vmatmul.mubr.bf16.gmra.mrb[0].mxu0 %v281
    %v846 = vpop.f32.mrb[0].mxu0
    %v847 = vadd.f32 0.0, %v846
    %v848 = vpop.f32.mrb[0].mxu0
    %v849 = vpop.f32.mrb[0].mxu0
    %v850 = vadd.f32 0.0, %v849
    %v851 = vpop.f32.mrb[0].mxu0
    %852 = vmatprep.mubr.bf16.mxu0 0
    %853 = vmatmul.mubr.bf16.gmra.mrb[0].mxu0 %v284
    %v854 = vpop.f32.mrb[0].mxu0
    %v855 = vadd.f32 0.0, %v854
    %v856 = vpop.f32.mrb[0].mxu0
    %v857 = vpop.f32.mrb[0].mxu0
    %v858 = vadd.f32 0.0, %v857
    %v859 = vpop.f32.mrb[0].mxu0
    %860 = vmatprep.mubr.bf16.mxu0 0
    %861 = vmatmul.mubr.bf16.gmra.mrb[0].mxu0 %v287
    %v862 = vpop.f32.mrb[0].mxu0
    %v863 = vadd.f32 0.0, %v862
    %v864 = vpop.f32.mrb[0].mxu0
    %v865 = vpop.f32.mrb[0].mxu0
    %v866 = vadd.f32 0.0, %v865
    %v867 = vpop.f32.mrb[0].mxu0
    %868 = vmatprep.mubr.bf16.mxu0 0
    %869 = vmatmul.mubr.bf16.gmra.mrb[0].mxu0 %v290
    %v870 = vpop.f32.mrb[0].mxu0
    %v871 = vadd.f32 0.0, %v870
    %v872 = vpop.f32.mrb[0].mxu0
    %v873 = vpop.f32.mrb[0].mxu0
    %v874 = vadd.f32 0.0, %v873
    %v875 = vpop.f32.mrb[0].mxu0
    %876 = vmatprep.mubr.bf16.mxu0 0
    %877 = vmatmul.mubr.bf16.gmra.mrb[0].mxu0 %v293
    %v878 = vpop.f32.mrb[0].mxu0
    %v879 = vadd.f32 0.0, %v878
    %v880 = vpop.f32.mrb[0].mxu0
    %v881 = vpop.f32.mrb[0].mxu0
    %v882 = vadd.f32 0.0, %v881
    %v883 = vpop.f32.mrb[0].mxu0
    %884 = vmatprep.mubr.bf16.mxu0 0
    %885 = vmatmul.mubr.bf16.gmra.mrb[0].mxu0 %v296
    %v886 = vpop.f32.mrb[0].mxu0
    %v887 = vadd.f32 0.0, %v886
    %v888 = vpop.f32.mrb[0].mxu0
    %v889 = vpop.f32.mrb[0].mxu0
    %v890 = vadd.f32 0.0, %v889
    %v891 = vpop.f32.mrb[0].mxu0
    %892 = vmatprep.mubr.bf16.mxu0 0
    %893 = vmatmul.mubr.bf16.gmra.mrb[0].mxu0 %v299
    %v894 = vpop.f32.mrb[0].mxu0
    %v895 = vadd.f32 0.0, %v894
    %v896 = vpop.f32.mrb[0].mxu0
    %v897 = vpop.f32.mrb[0].mxu0
    %v898 = vadd.f32 0.0, %v897
    %v899 = vpop.f32.mrb[0].mxu0
    %900 = vmatprep.mubr.bf16.mxu0 0
    %901 = vmatmul.mubr.bf16.gmra.mrb[0].mxu0 %v302
    %v902 = vpop.f32.mrb[0].mxu0
    %v903 = vadd.f32 0.0, %v902
    %v904 = vpop.f32.mrb[0].mxu0
    %v905 = vpop.f32.mrb[0].mxu0
    %v906 = vadd.f32 0.0, %v905
    %v907 = vpop.f32.mrb[0].mxu0
    %908 = vmatprep.mubr.bf16.mxu0 0
    %909 = vmatmul.mubr.bf16.gmra.mrb[0].mxu0 %v305
    %v910 = vpop.f32.mrb[0].mxu0
    %v911 = vadd.f32 0.0, %v910
    %v912 = vpop.f32.mrb[0].mxu0
    %v913 = vpop.f32.mrb[0].mxu0
    %v914 = vadd.f32 0.0, %v913
    %v915 = vpop.f32.mrb[0].mxu0
    %916 = vmatprep.mubr.bf16.mxu0 0
    %917 = vmatmul.mubr.bf16.gmra.mrb[0].mxu0 %v308
    %v918 = vpop.f32.mrb[0].mxu0
    %v919 = vadd.f32 0.0, %v918
    %v920 = vpop.f32.mrb[0].mxu0
    %v921 = vpop.f32.mrb[0].mxu0
    %v922 = vadd.f32 0.0, %v921
    %v923 = vpop.f32.mrb[0].mxu0
    %924 = vmatprep.mubr.bf16.mxu0 0
    %925 = vmatmul.mubr.bf16.gmra.mrb[0].mxu0 %v311
    %v926 = vpop.f32.mrb[0].mxu0
    %v927 = vadd.f32 0.0, %v926
    %v928 = vpop.f32.mrb[0].mxu0
    %v929 = vpop.f32.mrb[0].mxu0
    %v930 = vadd.f32 0.0, %v929
    %v931 = vpop.f32.mrb[0].mxu0
    %932 = vmatprep.mubr.bf16.mxu0 0
    %933 = vmatmul.mubr.bf16.gmra.mrb[0].mxu0 %v314
    %v934 = vpop.f32.mrb[0].mxu0
    %v935 = vadd.f32 0.0, %v934
    %v936 = vpop.f32.mrb[0].mxu0
    %v937 = vpop.f32.mrb[0].mxu0
    %v938 = vadd.f32 0.0, %v937
    %v939 = vpop.f32.mrb[0].mxu0
    %940 = vmatprep.mubr.bf16.mxu0 0
    %941 = vmatmul.mubr.bf16.gmra.mrb[0].mxu0 %v317
    %v942 = vpop.f32.mrb[0].mxu0
    %v943 = vadd.f32 0.0, %v942
    %v944 = vpop.f32.mrb[0].mxu0
    %v945 = vpop.f32.mrb[0].mxu0
    %v946 = vadd.f32 0.0, %v945
    %v947 = vpop.f32.mrb[0].mxu0
    %948 = vmatprep.mubr.bf16.mxu0 0
    %949 = vmatmul.mubr.bf16.gmra.mrb[0].mxu0 %v320
    %v950 = vpop.f32.mrb[0].mxu0
    %v951 = vadd.f32 0.0, %v950
    %v952 = vpop.f32.mrb[0].mxu0
    %v953 = vpop.f32.mrb[0].mxu0
    %v954 = vadd.f32 0.0, %v953
    %v955 = vpop.f32.mrb[0].mxu0
    %956 = vmatprep.mubr.bf16.mxu0 0
    %957 = vmatmul.mubr.bf16.gmra.mrb[0].mxu0 %v323
    %v958 = vpop.f32.mrb[0].mxu0
    %v959 = vadd.f32 0.0, %v958
    %v960 = vpop.f32.mrb[0].mxu0
    %v961 = vpop.f32.mrb[0].mxu0
    %v962 = vadd.f32 0.0, %v961
    %v963 = vpop.f32.mrb[0].mxu0
    %964 = vdwg.mxu0
    %s965 = scalar_lea.vmem %s2, 2
    %v966 = vld [vmem:[%s965] ss:$4 sm:$0x3]
    %v968 = vlaneseq
    %v969 = vshrl.u32 %v968, 7
    %v970 = vsub.s32 0, %v969
    %v971 = vrot.slane %v966, %v970
    %v972 = vlaneseq
    %v973 = vshrl.u32 %v972, 7
    %v974 = vsub.s32 1, %v973
    %v975 = vrot.slane %v966, %v974
    %v978 = vsel %vm272, %v971, 0.0
    %v979 = vsel %vm273, %v975, 0.0
    %v980 = vpack.c.bf16 %v978, %v978
    %v981 = vpack.c.bf16 %v979, %v979
    %v982 = vpack.c.bf16 %v842, %v839
    %v983 = vpack.c.bf16 %v850, %v847
    %v984 = vpack.c.bf16 %v858, %v855
    %v985 = vpack.c.bf16 %v866, %v863
    %v986 = vpack.c.bf16 %v874, %v871
    %v987 = vpack.c.bf16 %v882, %v879
    %v988 = vpack.c.bf16 %v890, %v887
    %v989 = vpack.c.bf16 %v898, %v895
    %v990 = vpack.c.bf16 %v906, %v903
    %v991 = vpack.c.bf16 %v914, %v911
    %v992 = vpack.c.bf16 %v922, %v919
    %v993 = vpack.c.bf16 %v930, %v927
    %v994 = vpack.c.bf16 %v938, %v935
    %v995 = vpack.c.bf16 %v946, %v943
    %v996 = vpack.c.bf16 %v954, %v951
    %v997 = vpack.c.bf16 %v962, %v959
    %998 = vmatprep.subr.bf16.mxu0 0
    %999 = vmatpush1.bf16.msra.mxu0 %v982
    %1000 = vmatprep.subr.bf16.mxu0 0
    %1001 = vmatpush1.bf16.msra.mxu0 %v983
    %1002 = vmatprep.subr.bf16.mxu0 0
    %1003 = vmatpush1.bf16.msra.mxu0 %v984
    %1004 = vmatprep.subr.bf16.mxu0 0
    %1005 = vmatpush1.bf16.msra.mxu0 %v985
    %1006 = vmatprep.subr.bf16.mxu0 0
    %1007 = vmatpush1.bf16.msra.mxu0 %v986
    %1008 = vmatprep.subr.bf16.mxu0 0
    %1009 = vmatpush1.bf16.msra.mxu0 %v987
    %1010 = vmatprep.subr.bf16.mxu0 0
    %1011 = vmatpush1.bf16.msra.mxu0 %v988
    %1012 = vmatprep.subr.bf16.mxu0 0
    %1013 = vmatpush1.bf16.msra.mxu0 %v989
    %1014 = vmatprep.subr.bf16.mxu0 0
    %1015 = vmatpush1.bf16.msra.mxu0 %v990
    %1016 = vmatprep.subr.bf16.mxu0 0
    %1017 = vmatpush1.bf16.msra.mxu0 %v991
    %1018 = vmatprep.subr.bf16.mxu0 0
    %1019 = vmatpush1.bf16.msra.mxu0 %v992
    %1020 = vmatprep.subr.bf16.mxu0 0
    %1021 = vmatpush1.bf16.msra.mxu0 %v993
    %1022 = vmatprep.subr.bf16.mxu0 0
    %1023 = vmatpush1.bf16.msra.mxu0 %v994
    %1024 = vmatprep.subr.bf16.mxu0 0
    %1025 = vmatpush1.bf16.msra.mxu0 %v995
    %1026 = vmatprep.subr.bf16.mxu0 0
    %1027 = vmatpush1.bf16.msra.mxu0 %v996
    %1028 = vmatprep.subr.bf16.mxu0 0
    %1029 = vmatpush1.bf16.msra.mxu0 %v997
    %1030 = vmatprep.mubr.bf16.mxu0 %v981
    %1031 = vmatmul.mubr.bf16.gmra.mrb[0].mxu0 %v980
    %v1032 = vpop.f32.mrb[0].mxu0
    %v1033 = vadd.f32 0.0, %v1032
    %v1034 = vpop.f32.mrb[0].mxu0
    %v1035 = vpop.f32.mrb[0].mxu0
    %v1036 = vpop.f32.mrb[0].mxu0
    %1037 = vdwg.mxu0
    %v1038 = vmul.f32 %v1033, 2.0
    %v1039 = vxor.u32 %v1038, 2147483648
    %v1040 = vmul.f32 %v1039, 1.442695
    %v1041 = vpow.pop %v1040
    %v1042 = vadd.f32 %v1041, 1.0
    %v1043 = vrcp.pop %v1042
    %v1044 = vmul.f32 1.0, %v1043
    %1045 = vst [vmem:[#allocation2] sm:$0xff] %v1044
    // Predicated region
    $region18: #{tpu_custom_call.1} parent=1 // pred_check
      _
    $region19: #{tpu_custom_call.1} parent=1 // pred_check_branch
      %1047 = sbr.rel (0) target = $region21
    $region20: #{tpu_custom_call.1} parent=1 // pred_region
      %s1049 = ssub.s32 128, 128
      %1050 = vsyncadd [#allocation3], %s1049
      %s1052 = sshll.u32 [#allocation2], 4
      %s1053 = int_to_ptr.vmem [resolvable:$true] %s1052
      %1055 = dma.vmem_to_hbm [thread:$0]  %s1053, 128, %s4, [#allocation3]
    $region21: #{tpu_custom_call.1} parent=1 // pred_fallthru
      _
    // Predicated region
    $region22: #{tpu_custom_call.1} parent=1 // pred_check
      _
    $region23: #{tpu_custom_call.1} parent=1 // pred_check_branch
      %1057 = sbr.rel (0) target = $region25
    $region24: #{tpu_custom_call.1} parent=1 // pred_region
      %1058 = dma.done [#allocation3], 128
    $region25: #{tpu_custom_call.1} parent=1 // pred_fallthru
      _
    %1059 = vsyncpa [#allocation3], 1

</llo_original>
